<compile_context>
chip_gen: v7x
topology: tpu7x:2x2x1
jax: 0.10.0
libtpu: 0.0.40
codegen_flags: <defaults>
</compile_context>

<pallas_src>
import jax
import jax.numpy as jnp
from jax.experimental import pallas as pl
from jax.experimental.pallas import tpu as pltpu


def _cross_stitch_kernel(s_ref, x_ref, o_ref):
    # s_ref: (T*T, bm, 1)  per-row scales; s_ref[i*T + j] scales task j -> task i
    # x_ref: (T, bm, HW)   stacked task features for this row tile
    # o_ref: (T, bm, HW)   stacked task outputs for this row tile
    n_tasks = x_ref.shape[0]
    xs = [x_ref[j] for j in range(n_tasks)]          # each (bm, HW), one vld per task
    for i in range(n_tasks):
        acc = s_ref[i * n_tasks + 0] * xs[0]         # (bm,1)*(bm,HW) -> (bm,HW)
        for j in range(1, n_tasks):
            acc = acc + s_ref[i * n_tasks + j] * xs[j]
        o_ref[i] = acc.astype(o_ref.dtype)


def _choose_row_block(n_rows, hw, n_tasks, itemsize, target_bytes=4 << 20):
    """Largest row tile bm that divides n_rows, is a multiple of 8, and keeps one
    stacked-task tile (n_tasks * bm * hw * itemsize) at/under ~target_bytes.
    Falls back to the full row extent (always a legal block shape)."""
    limit = max(8, target_bytes // max(1, n_tasks * hw * itemsize))
    best = None
    for bm in range(8, n_rows + 1, 8):
        if n_rows % bm == 0 and bm <= limit:
            best = bm
    return best if best is not None else n_rows


def cross_stitch_unit(stitch_params, task_features):
    """Fused CrossStitchUnit forward.

    stitch_params: (T, T, C) float32 — stitch_params[i, j, c] is the weight of
                   channel c of task j's features in task i's output
                   (ChannelWiseMultiply param of cross_stitch_unit[t_i][t_j]).
    task_features: (T, N, C, H, W) stacked task feature maps.
    returns:       (T, N, C, H, W) with out[i] = sum_j stitch_params[i,j].view(1,C,1,1) * x[j].
    """
    T, N, C, H, W = task_features.shape
    HW = H * W
    NR = N * C

    # Flatten to lane-dense 2D rows (pure reshape, no data permutation).
    x3 = task_features.reshape(T, NR, HW)
    # Per-row scales: broadcast channel params over the batch dim, (T*T, N*C, 1).
    s3 = jnp.broadcast_to(
        stitch_params.astype(task_features.dtype)[:, :, None, :], (T, T, N, C)
    ).reshape(T * T, NR, 1)

    bm = _choose_row_block(NR, HW, T, x3.dtype.itemsize)
    grid = (NR // bm,)

    out3 = pl.pallas_call(
        _cross_stitch_kernel,
        out_shape=jax.ShapeDtypeStruct((T, NR, HW), task_features.dtype),
        grid_spec=pltpu.PrefetchScalarGridSpec(
            num_scalar_prefetch=0,
            grid=grid,
            in_specs=[
                # per-row scales: tiny (T*T, bm, 1) slab, same row index as x
                pl.BlockSpec((T * T, bm, 1), lambda r: (0, r, 0)),
                # stacked features: all tasks for this row tile, full lane extent
                pl.BlockSpec((T, bm, HW), lambda r: (0, r, 0)),
            ],
            out_specs=pl.BlockSpec((T, bm, HW), lambda r: (0, r, 0)),
        ),
        compiler_params=pltpu.CompilerParams(
            dimension_semantics=("parallel",),
        ),
    )(s3, x3)

    return out3.reshape(T, N, C, H, W)


def channel_wise_multiply(param, x):
    """ChannelWiseMultiply.forward: param.view(1, C, 1, 1) * x  (T == 1 case)."""
    return cross_stitch_unit(param[None, None, :], x[None])[0]


if __name__ == "__main__":
    key = jax.random.PRNGKey(0)
    kx, kp = jax.random.split(key)

    # Two tasks, small NCHW features (as produced by the per-task backbones).
    T, N, C, H, W = 2, 2, 4, 16, 16
    alpha, beta = 0.9, 0.1

    feats = jax.random.normal(kx, (T, N, C, H, W), dtype=jnp.float32)

    # Cross-stitch params: alpha on the diagonal, beta off-diagonal (module's
    # init_value), plus a small per-channel jitter to exercise broadcasting.
    eye = jnp.eye(T, dtype=jnp.float32)[:, :, None]               # (T, T, 1)
    params = alpha * eye + beta * (1.0 - eye)                     # (T, T, 1)
    params = params + 0.01 * jax.random.normal(kp, (T, T, C), dtype=jnp.float32)

    # Fused cross-stitch unit.
    out = cross_stitch_unit(params, feats)
    out = jax.block_until_ready(out)

    ref = jnp.einsum("ijc,jnchw->inchw", params, feats)
    assert out.shape == ref.shape and out.dtype == ref.dtype
    assert jnp.allclose(out, ref, atol=1e-5, rtol=1e-5)

    # Degenerate single ChannelWiseMultiply.
    cw = channel_wise_multiply(params[0, 0], feats[0])
    cw = jax.block_until_ready(cw)
    cw_ref = params[0, 0].reshape(1, C, 1, 1) * feats[0]
    assert jnp.allclose(cw, cw_ref, atol=1e-6, rtol=1e-6)

    print("KERNEL_OK")
</pallas_src>

<mosaic_0001>
module attributes {stable_mosaic.version = 11 : i64} {
  func.func @_cross_stitch_kernel(%arg0: i32, %arg1: memref<4x8x1xf32, #tpu.memory_space<vmem>>, %arg2: memref<2x8x256xf32, #tpu.memory_space<vmem>>, %arg3: memref<2x8x256xf32, #tpu.memory_space<vmem>>) attributes {dimension_semantics = [#tpu.dimension_semantics<parallel>], iteration_bounds = array<i64: 1>, scalar_prefetch = 0 : i64, scratch_operands = 0 : i64, tpu.core_type = #tpu.core_type<tc>, window_params = [{transform_indices = @transform_0, window_bounds = array<i64: 4, 8, 1>}, {transform_indices = @transform_1, window_bounds = array<i64: 2, 8, 256>}, {transform_indices = @transform_2, window_bounds = array<i64: 2, 8, 256>}]} {
    %c0 = arith.constant 0 : index
    %c0_0 = arith.constant 0 : index
    %c0_1 = arith.constant 0 : index
    %0 = vector.load %arg2[%c0, %c0_0, %c0_1] : memref<2x8x256xf32, #tpu.memory_space<vmem>>, vector<1x8x256xf32>
    %1 = vector.shape_cast %0 : vector<1x8x256xf32> to vector<8x256xf32>
    %c1 = arith.constant 1 : index
    %c0_2 = arith.constant 0 : index
    %c0_3 = arith.constant 0 : index
    %2 = vector.load %arg2[%c1, %c0_2, %c0_3] : memref<2x8x256xf32, #tpu.memory_space<vmem>>, vector<1x8x256xf32>
    %3 = vector.shape_cast %2 : vector<1x8x256xf32> to vector<8x256xf32>
    %c0_4 = arith.constant 0 : index
    %c0_5 = arith.constant 0 : index
    %c0_6 = arith.constant 0 : index
    %4 = vector.load %arg1[%c0_4, %c0_5, %c0_6] : memref<4x8x1xf32, #tpu.memory_space<vmem>>, vector<1x8x1xf32>
    %5 = vector.shape_cast %4 : vector<1x8x1xf32> to vector<8x1xf32>
    %6 = vector.broadcast %5 : vector<8x1xf32> to vector<8x256xf32>
    %7 = arith.mulf %6, %1 : vector<8x256xf32>
    %c1_7 = arith.constant 1 : index
    %c0_8 = arith.constant 0 : index
    %c0_9 = arith.constant 0 : index
    %8 = vector.load %arg1[%c1_7, %c0_8, %c0_9] : memref<4x8x1xf32, #tpu.memory_space<vmem>>, vector<1x8x1xf32>
    %9 = vector.shape_cast %8 : vector<1x8x1xf32> to vector<8x1xf32>
    %10 = vector.broadcast %9 : vector<8x1xf32> to vector<8x256xf32>
    %11 = arith.mulf %10, %3 : vector<8x256xf32>
    %12 = arith.addf %7, %11 : vector<8x256xf32>
    %c0_10 = arith.constant 0 : index
    %c0_11 = arith.constant 0 : index
    %c0_12 = arith.constant 0 : index
    %13 = vector.load %arg3[%c0_10, %c0_11, %c0_12] : memref<2x8x256xf32, #tpu.memory_space<vmem>>, vector<1x8x256xf32>
    %14 = vector.shape_cast %13 : vector<1x8x256xf32> to vector<8x256xf32>
    %15 = vector.shape_cast %12 : vector<8x256xf32> to vector<1x8x256xf32>
    tpu.vector_store %arg3[%c0_10, %c0_11, %c0_12], %15 {strides = array<i32>} : memref<2x8x256xf32, #tpu.memory_space<vmem>>, vector<1x8x256xf32>,
    %c2 = arith.constant 2 : index
    %c0_13 = arith.constant 0 : index
    %c0_14 = arith.constant 0 : index
    %16 = vector.load %arg1[%c2, %c0_13, %c0_14] : memref<4x8x1xf32, #tpu.memory_space<vmem>>, vector<1x8x1xf32>
    %17 = vector.shape_cast %16 : vector<1x8x1xf32> to vector<8x1xf32>
    %18 = vector.broadcast %17 : vector<8x1xf32> to vector<8x256xf32>
    %19 = arith.mulf %18, %1 : vector<8x256xf32>
    %c3 = arith.constant 3 : index
    %c0_15 = arith.constant 0 : index
    %c0_16 = arith.constant 0 : index
    %20 = vector.load %arg1[%c3, %c0_15, %c0_16] : memref<4x8x1xf32, #tpu.memory_space<vmem>>, vector<1x8x1xf32>
    %21 = vector.shape_cast %20 : vector<1x8x1xf32> to vector<8x1xf32>
    %22 = vector.broadcast %21 : vector<8x1xf32> to vector<8x256xf32>
    %23 = arith.mulf %22, %3 : vector<8x256xf32>
    %24 = arith.addf %19, %23 : vector<8x256xf32>
    %c1_17 = arith.constant 1 : index
    %c0_18 = arith.constant 0 : index
    %c0_19 = arith.constant 0 : index
    %25 = vector.load %arg3[%c1_17, %c0_18, %c0_19] : memref<2x8x256xf32, #tpu.memory_space<vmem>>, vector<1x8x256xf32>
    %26 = vector.shape_cast %25 : vector<1x8x256xf32> to vector<8x256xf32>
    %27 = vector.shape_cast %24 : vector<8x256xf32> to vector<1x8x256xf32>
    tpu.vector_store %arg3[%c1_17, %c0_18, %c0_19], %27 {strides = array<i32>} : memref<2x8x256xf32, #tpu.memory_space<vmem>>, vector<1x8x256xf32>,
    return
  }
  func.func @transform_0(%arg0: i32) -> (i32, i32, i32) {
    %c0_i32 = arith.constant 0 : i32
    %c0_i32_0 = arith.constant 0 : i32
    %c0_i32_1 = arith.constant 0 : i32
    return %c0_i32, %arg0, %c0_i32_0 : i32, i32, i32
  }
  func.func @transform_1(%arg0: i32) -> (i32, i32, i32) {
    %c0_i32 = arith.constant 0 : i32
    %c0_i32_0 = arith.constant 0 : i32
    %c0_i32_1 = arith.constant 0 : i32
    return %c0_i32, %arg0, %c0_i32_0 : i32, i32, i32
  }
  func.func @transform_2(%arg0: i32) -> (i32, i32, i32) {
    %c0_i32 = arith.constant 0 : i32
    %c0_i32_0 = arith.constant 0 : i32
    %c0_i32_1 = arith.constant 0 : i32
    return %c0_i32, %arg0, %c0_i32_0 : i32, i32, i32
  }
}

</mosaic_0001>

<llo_original>
// kernel: tpu_custom_call.1
$region0: #{tpu_custom_call.1}
  #allocation0 [shape = 'u32[]', space=smem, size = 0x4, offset = 0x4, fixed_abs, tag = 'smem constant byte address 0x4 - core index']
  #allocation1 [shape = 'u32[144,128]{1,0:T(1,128)}', space=vmem, size = 0x12000, scoped, tag = 'internal scratch']
  %s0 = inlined_call_operand.vmem [shape: f32[4,8,1], index: 0, kind: input, shape index: {}]
  %s1 = inlined_call_operand.vmem [shape: f32[2,8,256], index: 1, kind: input, shape index: {}]
  %s2 = inlined_call_operand.hbm [shape: f32[2,8,256], index: 2, kind: output, shape index: {}]
  %s3 = sld [smem:[#allocation0]]
  $region18: #{tpu_custom_call.1} parent=0
    _
  %s5 = ssub.s32 1, %s3
  %s6 = scalar_select 0, %s5, %s3
  $region1: #{tpu_custom_call.1} parent=0
    #allocation2 [shape = 'u8[16384]{0}', space=vmem, size = 0x4000, scoped, tag = 'output window, operand 0, single buffered']
    #allocation3 [shape = 's32[1]{0}', space=sflag, size = 0x4, scoped, tag = 'scoped memory for tpu_custom_call.1']
    %7 = vsyncpa [#allocation3], 0
    // Predicated region
    $region2: #{tpu_custom_call.1} parent=1 // pred_check
      _
    $region3: #{tpu_custom_call.1} parent=1 // pred_check_branch
      %9 = sbr.rel (0) target = $region5
    $region4: #{tpu_custom_call.1} parent=1 // pred_region
      _
    $region5: #{tpu_custom_call.1} parent=1 // pred_fallthru
      _
    // Predicated region
    $region6: #{tpu_custom_call.1} parent=1 // pred_check
      _
    $region7: #{tpu_custom_call.1} parent=1 // pred_check_branch
      %11 = sbr.rel (0) target = $region9
    $region8: #{tpu_custom_call.1} parent=1 // pred_region
      _
    $region9: #{tpu_custom_call.1} parent=1 // pred_fallthru
      _
    %v12 = vld [vmem:[%s1] sm:$0xff]
    %v13 = vld [vmem:[%s1 + $0x8] sm:$0xff]
    %s14 = scalar_lea.vmem %s1, 16
    %v15 = vld [vmem:[%s14] sm:$0xff]
    %v16 = vld [vmem:[%s14 + $0x8] sm:$0xff]
    %v17 = vld [vmem:[%s0] sm:$0xff]
    %19 = vset.pattern.permute.xlu0 0
    %20 = vperm.xlu0 %19, %v17
    %v21 = vpop.permute.xlu0 %20
    %v23 = vmul.f32 %v21, %v12
    %v24 = vmul.f32 %v21, %v13
    %s25 = scalar_lea.vmem %s0, 8
    %v26 = vld [vmem:[%s25] sm:$0xff]
    %28 = vset.pattern.permute.xlu0 0
    %29 = vperm.xlu0 %28, %v26
    %v30 = vpop.permute.xlu0 %29
    %v32 = vmul.f32 %v30, %v15
    %v33 = vmul.f32 %v30, %v16
    %v34 = vadd.f32 %v23, %v32
    %v35 = vadd.f32 %v24, %v33
    %36 = vst [vmem:[#allocation2] sm:$0xff] %v34
    %37 = vst [vmem:[#allocation2 + $0x8] sm:$0xff] %v35
    %s38 = scalar_lea.vmem %s0, 16
    %v39 = vld [vmem:[%s38] sm:$0xff]
    %41 = vset.pattern.permute.xlu0 0
    %42 = vperm.xlu0 %41, %v39
    %v43 = vpop.permute.xlu0 %42
    %v45 = vmul.f32 %v43, %v12
    %v46 = vmul.f32 %v43, %v13
    %s47 = scalar_lea.vmem %s0, 24
    %v48 = vld [vmem:[%s47] sm:$0xff]
    %50 = vset.pattern.permute.xlu0 0
    %51 = vperm.xlu0 %50, %v48
    %v52 = vpop.permute.xlu0 %51
    %v54 = vmul.f32 %v52, %v15
    %v55 = vmul.f32 %v52, %v16
    %v56 = vadd.f32 %v45, %v54
    %v57 = vadd.f32 %v46, %v55
    %s58 = scalar_lea.vmem [#allocation2], 16
    %59 = vst [vmem:[%s58] sm:$0xff] %v56
    %60 = vst [vmem:[%s58 + $0x8] sm:$0xff] %v57
    // Predicated region
    $region10: #{tpu_custom_call.1} parent=1 // pred_check
      _
    $region11: #{tpu_custom_call.1} parent=1 // pred_check_branch
      %62 = sbr.rel (0) target = $region13
    $region12: #{tpu_custom_call.1} parent=1 // pred_region
      %s64 = ssub.s32 512, 512
      %65 = vsyncadd [#allocation3], %s64
      %s66 = sshll.u32 [#allocation2], 4
      %s67 = int_to_ptr.vmem [resolvable:$true] %s66
      %72 = dma.vmem_to_hbm [thread:$0]  %s67, 512, %s2, [#allocation3], 256, 256, 16
    $region13: #{tpu_custom_call.1} parent=1 // pred_fallthru
      _
    // Predicated region
    $region14: #{tpu_custom_call.1} parent=1 // pred_check
      _
    $region15: #{tpu_custom_call.1} parent=1 // pred_check_branch
      %74 = sbr.rel (0) target = $region17
    $region16: #{tpu_custom_call.1} parent=1 // pred_region
      %75 = dma.done [#allocation3], 512
    $region17: #{tpu_custom_call.1} parent=1 // pred_fallthru
      _
    %76 = vsyncpa [#allocation3], 1

</llo_original>
